<compile_context>
chip_gen: v7x
topology: tpu7x:2x2x1
jax: 0.10.0
libtpu: 0.0.40
codegen_flags: <defaults>
</compile_context>

<pallas_src>
import jax
import jax.numpy as jnp
from jax.experimental import pallas as pl
from jax.experimental.pallas import tpu as pltpu

_VMEM_LIMIT = 32 * 1024 * 1024  # safe scoped limit on v5e/v6e/v7x


def _round_up(x, m):
    return ((x + m - 1) // m) * m


# ----------------------------------------------------------------------------
# Pallas kernel 1: fused backbone 1x1 conv + ReLU + input_proj 1x1 conv,
# channel-major:   out[:, s] = Wp^T @ relu(Wb^T @ x[:, s] + bb) + bp
# ----------------------------------------------------------------------------
def _backbone_proj_kernel(x_ref, wbT_ref, bb_ref, wpT_ref, bp_ref, o_ref):
    x = x_ref[...]                                        # (Cin, TS) f32
    wbT = wbT_ref[...]                                    # (Cb, Cin) f32
    # First 1x1 conv (K = Cin = 3): three broadcast FMAs on the VPU — the MXU
    # would pay full systolic fill/drain for 3 useful rows.
    feat = wbT[:, 0:1] * x[0:1, :]                        # (Cb, TS)
    for c in range(1, x.shape[0]):
        feat = feat + wbT[:, c:c + 1] * x[c:c + 1, :]
    feat = jnp.maximum(feat + bb_ref[...], 0.0)           # bias+ReLU in f32 (v5e-safe)
    # Second 1x1 conv on the MXU: bf16 operands, f32 accumulation, K = Cb = 128.
    out = jnp.dot(wpT_ref[...], feat.astype(jnp.bfloat16),
                  preferred_element_type=jnp.float32)     # (hidden, TS)
    o_ref[...] = (out + bp_ref[...]).astype(o_ref.dtype)


def fused_backbone_input_proj(x_cm, wb, bb, wp, bp, *, ts_target=512):
    """x_cm: (B, Cin, S) channel-major pixels -> (B, hidden, S) f32."""
    B, Cin, S = x_cm.shape
    Cb = wb.shape[1]
    hidden = wp.shape[1]

    wbT = wb.T                                            # (Cb, Cin)  tiny, f32
    wpT = wp.T.astype(jnp.bfloat16)                       # (hidden, Cb)  bf16

    if S <= ts_target:
        ts, s_pad = S, S                                  # block = full dim (allowed)
    else:
        ts = ts_target                                    # multiple of 128
        s_pad = _round_up(S, ts)
        if s_pad != S:
            x_cm = jnp.pad(x_cm, ((0, 0), (0, 0), (0, s_pad - S)))

    out = pl.pallas_call(
        _backbone_proj_kernel,
        out_shape=jax.ShapeDtypeStruct((B, hidden, s_pad), jnp.float32),
        grid=(B, s_pad // ts),
        in_specs=[
            pl.BlockSpec((None, Cin, ts), lambda b, s: (b, 0, s)),
            pl.BlockSpec((Cb, Cin), lambda b, s: (0, 0)),
            pl.BlockSpec((Cb, 1), lambda b, s: (0, 0)),
            pl.BlockSpec((hidden, Cb), lambda b, s: (0, 0)),
            pl.BlockSpec((hidden, 1), lambda b, s: (0, 0)),
        ],
        out_specs=pl.BlockSpec((None, hidden, ts), lambda b, s: (b, 0, s)),
        compiler_params=pltpu.CompilerParams(
            dimension_semantics=("parallel", "parallel"),
            vmem_limit_bytes=_VMEM_LIMIT),
    )(x_cm, wbT, bb.reshape(Cb, 1), wpT, bp.reshape(hidden, 1))

    return out[:, :, :S] if s_pad != S else out


# ----------------------------------------------------------------------------
# Pallas kernel 2: fused 3-layer MLP head
#   out = relu(relu(x @ W0 + b0) @ W1 + b1) @ W2 + b2
# ----------------------------------------------------------------------------
def _mlp3_kernel(x_ref, w0_ref, b0_ref, w1_ref, b1_ref, w2_ref, b2_ref, o_ref):
    h = jnp.dot(x_ref[...], w0_ref[...], preferred_element_type=jnp.float32)
    h = jnp.maximum(h + b0_ref[...], 0.0)                 # f32 elementwise (v5e-safe)
    h = jnp.dot(h.astype(jnp.bfloat16), w1_ref[...],
                preferred_element_type=jnp.float32)
    h = jnp.maximum(h + b1_ref[...], 0.0)
    h = jnp.dot(h.astype(jnp.bfloat16), w2_ref[...],
                preferred_element_type=jnp.float32)
    o_ref[...] = (h + b2_ref[...]).astype(o_ref.dtype)


def fused_mlp3(x, w0, b0, w1, b1, w2, b2, *, tm_target=256, min_pallas_rows=64):
    """x: (M, hidden) -> (M, vocab).  Intermediates never hit HBM."""
    M, hidden = x.shape
    mh = w0.shape[1]
    vocab = w2.shape[1]

    if M < min_pallas_rows:
        # Tiny-M fallback: kernel dispatch + pipeline prologue would dominate;
        # XLA fuses these three matmuls fine at this size.
        h = jnp.maximum(x @ w0 + b0, 0.0)
        h = jnp.maximum(h @ w1 + b1, 0.0)
        return h @ w2 + b2

    xb = x.astype(jnp.bfloat16)
    w0b = w0.astype(jnp.bfloat16)
    w1b = w1.astype(jnp.bfloat16)
    w2b = w2.astype(jnp.bfloat16)

    # >= 2 grid steps (keeps both v7x TensorCores busy), rows padded to 8-multiple.
    n_tiles = max(2, -(-M // tm_target))
    tm = _round_up(-(-M // n_tiles), 8)
    m_pad = tm * n_tiles
    if m_pad != M:
        xb = jnp.pad(xb, ((0, m_pad - M), (0, 0)))

    out = pl.pallas_call(
        _mlp3_kernel,
        out_shape=jax.ShapeDtypeStruct((m_pad, vocab), jnp.float32),
        grid=(n_tiles,),
        in_specs=[
            pl.BlockSpec((tm, hidden), lambda i: (i, 0)),
            pl.BlockSpec((hidden, mh), lambda i: (0, 0)),
            pl.BlockSpec((1, mh), lambda i: (0, 0)),
            pl.BlockSpec((mh, mh), lambda i: (0, 0)),
            pl.BlockSpec((1, mh), lambda i: (0, 0)),
            pl.BlockSpec((mh, vocab), lambda i: (0, 0)),
            pl.BlockSpec((1, vocab), lambda i: (0, 0)),
        ],
        out_specs=pl.BlockSpec((tm, vocab), lambda i: (i, 0)),
        compiler_params=pltpu.CompilerParams(
            dimension_semantics=("parallel",),
            vmem_limit_bytes=_VMEM_LIMIT),
    )(xb, w0b, b0.reshape(1, mh), w1b, b1.reshape(1, mh),
      w2b, b2.reshape(1, vocab))

    return out[:M] if m_pad != M else out


# ----------------------------------------------------------------------------
# Stand-in for the externally injected transformer (channel-major src)
# ----------------------------------------------------------------------------
def transformer_standin(params, src_cm, src_mask, target_exp, target_exp_mask):
    """src_cm: (B, hidden, S) (PyTorch layout of `src`); src_mask: (B, S) bool
    (True = pad); target_exp: (B, T) int32 tokens; returns hs: (B, T, hidden)."""
    # TODO(synk): real transformer is an externally injected module (architecture
    # unknown here); deterministic single cross-attention stand-in in plain JAX.
    hidden = src_cm.shape[1]
    emb = params["tok_emb"][target_exp]                                 # (B, T, hidden)
    scores = jnp.einsum("bth,bhs->bts", emb, src_cm) / jnp.sqrt(jnp.float32(hidden))
    scores = jnp.where(src_mask[:, None, :], -1e9, scores)
    attn = jax.nn.softmax(scores, axis=-1)
    ctx = jnp.einsum("bts,bhs->bth", attn, src_cm) + emb
    ctx = jnp.where(target_exp_mask[:, :, None], 0.0, ctx)
    return ctx                                                          # (B, T, hidden)


# ----------------------------------------------------------------------------
# CaptionLoc forward
# ----------------------------------------------------------------------------
def caption_loc_forward(params, images, loc_feats, target_exp, target_exp_mask):
    # TODO(synk): real backbone is an externally injected module (e.g. ResNet);
    # deterministic stand-in = 4x4 average pool (plain jnp, stays NCHW, no
    # transpose) + 1x1 conv (3 -> Cb) + ReLU, the conv fused with input_proj
    # inside a single Pallas kernel below.
    B, C, H0, W0 = images.shape
    pooled = images.reshape(B, C, H0 // 4, 4, W0 // 4, 4).mean(axis=(3, 5))
    Hf, Wf = pooled.shape[2], pooled.shape[3]
    x_cm = pooled.reshape(B, C, Hf * Wf)                                # (B, C, S)

    hidden = params["input_proj_w"].shape[1]

    # backbone 1x1 conv + ReLU + input_proj Conv2d(Cb, hidden, 1), fused.
    t_src = fused_backbone_input_proj(
        x_cm, params["backbone_w"], params["backbone_b"],
        params["input_proj_w"], params["input_proj_b"])                 # (B, hidden, S)
    S = t_src.shape[2]
    t_mask = jnp.zeros((B, S), dtype=bool)                              # no padding

    # loc_proj: Linear(7, hidden) — tiny, plain jnp (a pallas_call would be
    # pure dispatch overhead).
    loc_src = loc_feats @ params["loc_proj_w"] + params["loc_proj_b"]   # (B, hidden)
    loc_src = loc_src[:, :, None]                                       # (B, hidden, 1)
    loc_mask = jnp.zeros((B, 1), dtype=bool)

    # concat along the sequence axis (dim 2), exactly like torch.concat(..., 2).
    src = jnp.concatenate([t_src, loc_src], axis=2)                     # (B, hidden, S+1)
    mask = jnp.concatenate([t_mask, loc_mask], axis=1)                  # (B, S+1)

    hs = transformer_standin(params, src, mask, target_exp, target_exp_mask)  # (B,T,hidden)

    # MLP head: hidden -> 512 -> 512 -> vocab, ReLU on all but last — fused.
    Bt, T, _ = hs.shape
    out = fused_mlp3(hs.reshape(Bt * T, hidden),
                     params["mlp_w0"], params["mlp_b0"],
                     params["mlp_w1"], params["mlp_b1"],
                     params["mlp_w2"], params["mlp_b2"])
    return out.reshape(Bt, T, -1)                                       # (B, T, vocab)


# ----------------------------------------------------------------------------
# Deterministic parameter init
# ----------------------------------------------------------------------------
def init_params(key, *, c_img=3, cb=128, hidden=128, vocab=128, mlp_hidden=512):
    ks = jax.random.split(key, 16)

    def dense(k, fan_in, fan_out):
        return (jax.random.normal(k, (fan_in, fan_out), jnp.float32)
                / jnp.sqrt(jnp.float32(fan_in)))

    return {
        # backbone stand-in (1x1 conv 3 -> Cb); Cb=128 keeps feat lane-dense.
        "backbone_w": dense(ks[0], c_img, cb),
        "backbone_b": jnp.zeros((cb,), jnp.float32),
        # input_proj: Conv2d(Cb, hidden, 1)  stored as (Cb, hidden)
        "input_proj_w": dense(ks[1], cb, hidden),
        "input_proj_b": 0.01 * jnp.arange(hidden, dtype=jnp.float32),
        # loc_proj: Linear(7, hidden)
        "loc_proj_w": dense(ks[2], 7, hidden),
        "loc_proj_b": jnp.zeros((hidden,), jnp.float32),
        # transformer stand-in token embedding
        "tok_emb": dense(ks[3], vocab, hidden),
        # MLP(hidden, 512, vocab, 3)
        "mlp_w0": dense(ks[4], hidden, mlp_hidden),
        "mlp_b0": jnp.zeros((mlp_hidden,), jnp.float32),
        "mlp_w1": dense(ks[5], mlp_hidden, mlp_hidden),
        "mlp_b1": jnp.zeros((mlp_hidden,), jnp.float32),
        "mlp_w2": dense(ks[6], mlp_hidden, vocab),
        "mlp_b2": jnp.zeros((vocab,), jnp.float32),
    }


if __name__ == "__main__":
    key = jax.random.PRNGKey(0)
    B, T, vocab, hidden = 2, 64, 128, 128
    params = init_params(key, hidden=hidden, vocab=vocab)

    k1, k2, k3 = jax.random.split(jax.random.PRNGKey(1), 3)
    images = jax.random.normal(k1, (B, 3, 32, 32), jnp.float32)         # t_samples (NCHW)
    loc_feats = jax.random.normal(k2, (B, 7), jnp.float32)
    target_exp = jax.random.randint(k3, (B, T), 0, vocab, jnp.int32)
    target_exp_mask = jnp.zeros((B, T), dtype=bool)

    out = caption_loc_forward(params, images, loc_feats, target_exp, target_exp_mask)
    out = jax.block_until_ready(out)
    assert out.shape == (B, T, vocab), out.shape
    assert jnp.all(jnp.isfinite(out))
    print("KERNEL_OK")
</pallas_src>

<mosaic_0001>
module attributes {stable_mosaic.version = 11 : i64} {
  func.func @_backbone_proj_kernel(%arg0: i32, %arg1: i32, %arg2: memref<1x3x64xf32, #tpu.memory_space<vmem>>, %arg3: memref<128x3xf32, #tpu.memory_space<vmem>>, %arg4: memref<128x1xf32, #tpu.memory_space<vmem>>, %arg5: memref<128x128xbf16, #tpu.memory_space<vmem>>, %arg6: memref<128x1xf32, #tpu.memory_space<vmem>>, %arg7: memref<1x128x64xf32, #tpu.memory_space<vmem>>) attributes {dimension_semantics = [#tpu.dimension_semantics<parallel>, #tpu.dimension_semantics<parallel>], iteration_bounds = array<i64: 2, 1>, scalar_prefetch = 0 : i64, scratch_operands = 0 : i64, tpu.core_type = #tpu.core_type<tc>, window_params = [{transform_indices = @transform_0, window_bounds = array<i64: 1, 3, 64>}, {pipeline_mode = #tpu.pipeline_mode<synchronous>, transform_indices = @transform_1, window_bounds = array<i64: 128, 3>}, {pipeline_mode = #tpu.pipeline_mode<synchronous>, transform_indices = @transform_2, window_bounds = array<i64: 128, 1>}, {pipeline_mode = #tpu.pipeline_mode<synchronous>, transform_indices = @transform_3, window_bounds = array<i64: 128, 128>}, {pipeline_mode = #tpu.pipeline_mode<synchronous>, transform_indices = @transform_4, window_bounds = array<i64: 128, 1>}, {transform_indices = @transform_5, window_bounds = array<i64: 1, 128, 64>}]} {
    %c0 = arith.constant 0 : index
    %c0_0 = arith.constant 0 : index
    %c0_1 = arith.constant 0 : index
    %0 = vector.load %arg2[%c0, %c0_0, %c0_1] : memref<1x3x64xf32, #tpu.memory_space<vmem>>, vector<1x3x64xf32>
    %1 = vector.shape_cast %0 : vector<1x3x64xf32> to vector<3x64xf32>
    %c0_2 = arith.constant 0 : index
    %c0_3 = arith.constant 0 : index
    %2 = vector.load %arg3[%c0_2, %c0_3] : memref<128x3xf32, #tpu.memory_space<vmem>>, vector<128x3xf32>
    %3 = vector.extract_strided_slice %2 {offsets = [0, 0], sizes = [128, 1], strides = [1, 1]} : vector<128x3xf32> to vector<128x1xf32>
    %4 = vector.extract_strided_slice %1 {offsets = [0, 0], sizes = [1, 64], strides = [1, 1]} : vector<3x64xf32> to vector<1x64xf32>
    %5 = vector.broadcast %3 : vector<128x1xf32> to vector<128x64xf32>
    %6 = vector.broadcast %4 : vector<1x64xf32> to vector<128x64xf32>
    %7 = arith.mulf %5, %6 : vector<128x64xf32>
    %8 = vector.extract_strided_slice %2 {offsets = [0, 1], sizes = [128, 1], strides = [1, 1]} : vector<128x3xf32> to vector<128x1xf32>
    %9 = vector.extract_strided_slice %1 {offsets = [1, 0], sizes = [1, 64], strides = [1, 1]} : vector<3x64xf32> to vector<1x64xf32>
    %10 = vector.broadcast %8 : vector<128x1xf32> to vector<128x64xf32>
    %11 = vector.broadcast %9 : vector<1x64xf32> to vector<128x64xf32>
    %12 = arith.mulf %10, %11 : vector<128x64xf32>
    %13 = arith.addf %7, %12 : vector<128x64xf32>
    %14 = vector.extract_strided_slice %2 {offsets = [0, 2], sizes = [128, 1], strides = [1, 1]} : vector<128x3xf32> to vector<128x1xf32>
    %15 = vector.extract_strided_slice %1 {offsets = [2, 0], sizes = [1, 64], strides = [1, 1]} : vector<3x64xf32> to vector<1x64xf32>
    %16 = vector.broadcast %14 : vector<128x1xf32> to vector<128x64xf32>
    %17 = vector.broadcast %15 : vector<1x64xf32> to vector<128x64xf32>
    %18 = arith.mulf %16, %17 : vector<128x64xf32>
    %19 = arith.addf %13, %18 : vector<128x64xf32>
    %c0_4 = arith.constant 0 : index
    %c0_5 = arith.constant 0 : index
    %20 = vector.load %arg4[%c0_4, %c0_5] : memref<128x1xf32, #tpu.memory_space<vmem>>, vector<128x1xf32>
    %21 = vector.broadcast %20 : vector<128x1xf32> to vector<128x64xf32>
    %22 = arith.addf %19, %21 : vector<128x64xf32>
    %cst = arith.constant 0.000000e+00 : f32
    %23 = vector.broadcast %cst : f32 to vector<128x64xf32>
    %24 = arith.maximumf %22, %23 : vector<128x64xf32>
    %c0_6 = arith.constant 0 : index
    %c0_7 = arith.constant 0 : index
    %25 = vector.load %arg5[%c0_6, %c0_7] : memref<128x128xbf16, #tpu.memory_space<vmem>>, vector<128x128xbf16>
    %26 = arith.truncf %24 : vector<128x64xf32> to vector<128x64xbf16>
    %cst_8 = arith.constant dense<0.000000e+00> : vector<128x64xf32>
    %27 = tpu.matmul %25, %26, %cst_8 {dimension_numbers = #tpu.dot_dimension_numbers<[1], [0], [0], [1], [0, 0, 1, 1], [], []>} : vector<128x128xbf16>, vector<128x64xbf16>, vector<128x64xf32> -> vector<128x64xf32>
    %c0_9 = arith.constant 0 : index
    %c0_10 = arith.constant 0 : index
    %28 = vector.load %arg6[%c0_9, %c0_10] : memref<128x1xf32, #tpu.memory_space<vmem>>, vector<128x1xf32>
    %29 = vector.broadcast %28 : vector<128x1xf32> to vector<128x64xf32>
    %30 = arith.addf %27, %29 : vector<128x64xf32>
    %c0_11 = arith.constant 0 : index
    %c0_12 = arith.constant 0 : index
    %c0_13 = arith.constant 0 : index
    %31 = vector.load %arg7[%c0_11, %c0_12, %c0_13] : memref<1x128x64xf32, #tpu.memory_space<vmem>>, vector<1x128x64xf32>
    %32 = vector.shape_cast %31 : vector<1x128x64xf32> to vector<128x64xf32>
    %33 = vector.shape_cast %30 : vector<128x64xf32> to vector<1x128x64xf32>
    tpu.vector_store %arg7[%c0_11, %c0_12, %c0_13], %33 {strides = array<i32>} : memref<1x128x64xf32, #tpu.memory_space<vmem>>, vector<1x128x64xf32>,
    return
  }
  func.func @transform_0(%arg0: i32, %arg1: i32) -> (i32, i32, i32) {
    %c0_i32 = arith.constant 0 : i32
    %c0_i32_0 = arith.constant 0 : i32
    return %arg0, %c0_i32, %arg1 : i32, i32, i32
  }
  func.func @transform_1(%arg0: i32, %arg1: i32) -> (i32, i32) {
    %c0_i32 = arith.constant 0 : i32
    %c0_i32_0 = arith.constant 0 : i32
    %c0_i32_1 = arith.constant 0 : i32
    return %c0_i32, %c0_i32_0 : i32, i32
  }
  func.func @transform_2(%arg0: i32, %arg1: i32) -> (i32, i32) {
    %c0_i32 = arith.constant 0 : i32
    %c0_i32_0 = arith.constant 0 : i32
    %c0_i32_1 = arith.constant 0 : i32
    return %c0_i32, %c0_i32_0 : i32, i32
  }
  func.func @transform_3(%arg0: i32, %arg1: i32) -> (i32, i32) {
    %c0_i32 = arith.constant 0 : i32
    %c0_i32_0 = arith.constant 0 : i32
    %c0_i32_1 = arith.constant 0 : i32
    return %c0_i32, %c0_i32_0 : i32, i32
  }
  func.func @transform_4(%arg0: i32, %arg1: i32) -> (i32, i32) {
    %c0_i32 = arith.constant 0 : i32
    %c0_i32_0 = arith.constant 0 : i32
    %c0_i32_1 = arith.constant 0 : i32
    return %c0_i32, %c0_i32_0 : i32, i32
  }
  func.func @transform_5(%arg0: i32, %arg1: i32) -> (i32, i32, i32) {
    %c0_i32 = arith.constant 0 : i32
    %c0_i32_0 = arith.constant 0 : i32
    return %arg0, %c0_i32, %arg1 : i32, i32, i32
  }
}

</mosaic_0001>

<llo_original>
// kernel: tpu_custom_call.1
$region0: #{tpu_custom_call.1}
  #allocation0 [shape = 'u32[]', space=smem, size = 0x4, offset = 0x4, fixed_abs, tag = 'smem constant byte address 0x4 - core index']
  #allocation1 [shape = 'u32[144,128]{1,0:T(1,128)}', space=vmem, size = 0x12000, scoped, tag = 'internal scratch']
  %s0 = inlined_call_operand.vmem [shape: f32[2,3,64], index: 0, kind: input, shape index: {}]
  %s1 = inlined_call_operand.vmem [shape: f32[128,3], index: 1, kind: input, shape index: {}]
  %s2 = inlined_call_operand.vmem [shape: f32[128,1], index: 2, kind: input, shape index: {}]
  %s3 = inlined_call_operand.vmem [shape: bf16[128,128], index: 3, kind: input, shape index: {}]
  %s4 = inlined_call_operand.vmem [shape: f32[128,1], index: 4, kind: input, shape index: {}]
  %s5 = inlined_call_operand.vmem [shape: f32[2,128,64], index: 5, kind: output, shape index: {}]
  %s6 = sld [smem:[#allocation0]]
  $region53: #{tpu_custom_call.1} parent=0
    _
  %s8 = ssub.s32 1, %s6
  %s9 = scalar_select 0, %s8, %s6
  loop: start=0, step=1, limit=4
  $region2: #{tpu_custom_call.1} parent=0 // loop_pre_header
    _
  $region3: #{tpu_custom_call.1} parent=0 // loop_header
    %s11 = sphi 0, %s15
    %p12 = scmp.ge.s32.totalorder %s11, 4
    %s18 = sphi 0, %s30
    %s19 = sphi 0, %s26
    %s20 = sphi 0, %s18
    %s21 = sphi 0, %s19
    %s22 = sphi 0, %s20
    %s23 = sphi 0, %s21
    %s35 = sphi 0, %s37
    %s38 = sphi 0, %s35
    %s39 = sphi 0, %s38
    %s55 = sphi 0, %s39
    %s59 = sphi 0, %s59
    %s61 = sphi 0, %s59
    %s62 = sphi 0, %s61
    %s76 = sphi 0, %s62
    %s80 = sphi 0, %s80
    %s82 = sphi 0, %s80
    %s83 = sphi 0, %s82
    %s97 = sphi 0, %s83
    %s101 = sphi 0, %s101
    %s103 = sphi 0, %s101
    %s104 = sphi 0, %s103
    %s118 = sphi 0, %s104
    %s122 = sphi 0, %s122
    %s124 = sphi 0, %s122
    %s125 = sphi 0, %s124
    %s139 = sphi 0, %s125
    %s147 = sphi 0, %s149
    %s150 = sphi 0, %s147
    %s151 = sphi 0, %s150
    %s167 = sphi 0, %s151
  $region4: #{tpu_custom_call.1} parent=0 // loop_header_branch
    %14 = sbr.rel (%p12) target = $region8
  $region5: #{tpu_custom_call.1} parent=0 // loop_body
    %s16 = ssub.s32 %s11, 1
    %s17 = ssub.s32 %s11, 2
    %s24 = sadd.s32 1, %s19
    %p25 = scmp.ge.s32.totalorder %s24, 1
    %s26 = scalar_select %p25, 0, %s24
    %s27 = sadd.s32 1, %s18
    %s28 = scalar_select %p25, %s27, %s18
    %p29 = scmp.ge.s32.totalorder %s28, 2
    %s30 = scalar_select %p29, 0, %s28
    %s31 = ssub.s32 %s18, %s30
    %s32 = ssub.s32 %s19, %s26
    %s33 = sor.u32 %s31, %s32
    %p34 = scmp.eq.s32.totalorder %s33, 0
    %s36 = sadd.s32 %s35, 1
    %s37 = scalar_select %p34, %s35, %s36
    %p40 = pneg %p34
    %p41 = scmp.eq.s32.totalorder %s11, 1
    %p42 = por %p40, %p41
    %p43 = scmp.ne.s32.totalorder %s35, %s38
    %p44 = scmp.eq.s32.totalorder %s11, 0
    %p45 = por %p43, %p44
    %p46 = scmp.ne.s32.totalorder %s35, %s38
    %p47 = scmp.eq.s32.totalorder %s16, 1
    %p48 = por %p46, %p47
    %p49 = scmp.ne.s32.totalorder %s38, %s39
    %p50 = scmp.eq.s32.totalorder %s16, 0
    %p51 = por %p49, %p50
    %p52 = scmp.ne.s32.totalorder %s38, %s39
    %p53 = scmp.eq.s32.totalorder %s17, 1
    %p54 = por %p52, %p53
    %p56 = scmp.ne.s32.totalorder %s39, %s55
    %p57 = scmp.eq.s32.totalorder %s17, 0
    %p58 = por %p56, %p57
    %s60 = sadd.s32 %s59, 1
    %p63 = scmp.eq.s32.totalorder %s11, 1
    %p64 = scmp.ne.s32.totalorder %s59, %s61
    %p65 = scmp.eq.s32.totalorder %s11, 0
    %p66 = por %p64, %p65
    %p67 = scmp.ne.s32.totalorder %s59, %s61
    %p68 = scmp.eq.s32.totalorder %s16, 1
    %p69 = por %p67, %p68
    %p70 = scmp.ne.s32.totalorder %s61, %s62
    %p71 = scmp.eq.s32.totalorder %s16, 0
    %p72 = por %p70, %p71
    %p73 = scmp.ne.s32.totalorder %s61, %s62
    %p74 = scmp.eq.s32.totalorder %s17, 1
    %p75 = por %p73, %p74
    %p77 = scmp.ne.s32.totalorder %s62, %s76
    %p78 = scmp.eq.s32.totalorder %s17, 0
    %p79 = por %p77, %p78
    %s81 = sadd.s32 %s80, 1
    %p84 = scmp.eq.s32.totalorder %s11, 1
    %p85 = scmp.ne.s32.totalorder %s80, %s82
    %p86 = scmp.eq.s32.totalorder %s11, 0
    %p87 = por %p85, %p86
    %p88 = scmp.ne.s32.totalorder %s80, %s82
    %p89 = scmp.eq.s32.totalorder %s16, 1
    %p90 = por %p88, %p89
    %p91 = scmp.ne.s32.totalorder %s82, %s83
    %p92 = scmp.eq.s32.totalorder %s16, 0
    %p93 = por %p91, %p92
    %p94 = scmp.ne.s32.totalorder %s82, %s83
    %p95 = scmp.eq.s32.totalorder %s17, 1
    %p96 = por %p94, %p95
    %p98 = scmp.ne.s32.totalorder %s83, %s97
    %p99 = scmp.eq.s32.totalorder %s17, 0
    %p100 = por %p98, %p99
    %s102 = sadd.s32 %s101, 1
    %p105 = scmp.eq.s32.totalorder %s11, 1
    %p106 = scmp.ne.s32.totalorder %s101, %s103
    %p107 = scmp.eq.s32.totalorder %s11, 0
    %p108 = por %p106, %p107
    %p109 = scmp.ne.s32.totalorder %s101, %s103
    %p110 = scmp.eq.s32.totalorder %s16, 1
    %p111 = por %p109, %p110
    %p112 = scmp.ne.s32.totalorder %s103, %s104
    %p113 = scmp.eq.s32.totalorder %s16, 0
    %p114 = por %p112, %p113
    %p115 = scmp.ne.s32.totalorder %s103, %s104
    %p116 = scmp.eq.s32.totalorder %s17, 1
    %p117 = por %p115, %p116
    %p119 = scmp.ne.s32.totalorder %s104, %s118
    %p120 = scmp.eq.s32.totalorder %s17, 0
    %p121 = por %p119, %p120
    %s123 = sadd.s32 %s122, 1
    %p126 = scmp.eq.s32.totalorder %s11, 1
    %p127 = scmp.ne.s32.totalorder %s122, %s124
    %p128 = scmp.eq.s32.totalorder %s11, 0
    %p129 = por %p127, %p128
    %p130 = scmp.ne.s32.totalorder %s122, %s124
    %p131 = scmp.eq.s32.totalorder %s16, 1
    %p132 = por %p130, %p131
    %p133 = scmp.ne.s32.totalorder %s124, %s125
    %p134 = scmp.eq.s32.totalorder %s16, 0
    %p135 = por %p133, %p134
    %p136 = scmp.ne.s32.totalorder %s124, %s125
    %p137 = scmp.eq.s32.totalorder %s17, 1
    %p138 = por %p136, %p137
    %p140 = scmp.ne.s32.totalorder %s125, %s139
    %p141 = scmp.eq.s32.totalorder %s17, 0
    %p142 = por %p140, %p141
    %s143 = ssub.s32 %s18, %s30
    %s144 = ssub.s32 %s19, %s26
    %s145 = sor.u32 %s143, %s144
    %p146 = scmp.eq.s32.totalorder %s145, 0
    %s148 = sadd.s32 %s147, 1
    %s149 = scalar_select %p146, %s147, %s148
    %p152 = pneg %p146
    %p153 = scmp.eq.s32.totalorder %s11, 1
    %p154 = por %p152, %p153
    %p155 = scmp.ne.s32.totalorder %s147, %s150
    %p156 = scmp.eq.s32.totalorder %s11, 0
    %p157 = por %p155, %p156
    %p158 = scmp.ne.s32.totalorder %s147, %s150
    %p159 = scmp.eq.s32.totalorder %s16, 1
    %p160 = por %p158, %p159
    %p161 = scmp.ne.s32.totalorder %s150, %s151
    %p162 = scmp.eq.s32.totalorder %s16, 0
    %p163 = por %p161, %p162
    %p164 = scmp.ne.s32.totalorder %s150, %s151
    %p165 = scmp.eq.s32.totalorder %s17, 1
    %p166 = por %p164, %p165
    %p168 = scmp.ne.s32.totalorder %s151, %s167
    %p169 = scmp.eq.s32.totalorder %s17, 0
    %p170 = por %p168, %p169
    %p171 = scmp.le.s32.totalorder 1, %s11
    %p172 = scmp.lt.s32.totalorder %s11, 3
    %p173 = pnand %p171, %p172
    %p174 = pneg %p173
    // Predicated region
    $region9: #{tpu_custom_call.1} parent=5 // pred_check
      _
    $region10: #{tpu_custom_call.1} parent=5 // pred_check_branch
      %176 = sbr.rel (%p173) target = $region12
    $region11: #{tpu_custom_call.1} parent=5 // pred_region
      %s177 = ssub.s32 %s11, 1
      // Predicated region
      $region13: #{tpu_custom_call.1} parent=11 // pred_check
        %p178 = pneg %p72
      $region14: #{tpu_custom_call.1} parent=11 // pred_check_branch
        %180 = sbr.rel (%p178) target = $region16
      $region15: #{tpu_custom_call.1} parent=11 // pred_region
        _
      $region16: #{tpu_custom_call.1} parent=11 // pred_fallthru
        _
      // Predicated region
      $region17: #{tpu_custom_call.1} parent=11 // pred_check
        %p181 = pneg %p93
      $region18: #{tpu_custom_call.1} parent=11 // pred_check_branch
        %183 = sbr.rel (%p181) target = $region20
      $region19: #{tpu_custom_call.1} parent=11 // pred_region
        _
      $region20: #{tpu_custom_call.1} parent=11 // pred_fallthru
        _
      // Predicated region
      $region21: #{tpu_custom_call.1} parent=11 // pred_check
        %p184 = pneg %p114
      $region22: #{tpu_custom_call.1} parent=11 // pred_check_branch
        %186 = sbr.rel (%p184) target = $region24
      $region23: #{tpu_custom_call.1} parent=11 // pred_region
        _
      $region24: #{tpu_custom_call.1} parent=11 // pred_fallthru
        _
      // Predicated region
      $region25: #{tpu_custom_call.1} parent=11 // pred_check
        %p187 = pneg %p135
      $region26: #{tpu_custom_call.1} parent=11 // pred_check_branch
        %189 = sbr.rel (%p187) target = $region28
      $region27: #{tpu_custom_call.1} parent=11 // pred_region
        _
      $region28: #{tpu_custom_call.1} parent=11 // pred_fallthru
        _
    $region12: #{tpu_custom_call.1} parent=5 // pred_fallthru
      _
    %p190 = scmp.lt.s32.totalorder %s11, 2
    // Predicated region
    $region29: #{tpu_custom_call.1} parent=5 // pred_check
      %p191 = pneg %p190
    $region30: #{tpu_custom_call.1} parent=5 // pred_check_branch
      %193 = sbr.rel (%p191) target = $region32
    $region31: #{tpu_custom_call.1} parent=5 // pred_region
      // Predicated region
      $region33: #{tpu_custom_call.1} parent=31 // pred_check
        %p194 = pneg %p45
      $region34: #{tpu_custom_call.1} parent=31 // pred_check_branch
        %196 = sbr.rel (%p194) target = $region36
      $region35: #{tpu_custom_call.1} parent=31 // pred_region
        %p197 = scmp.lt.s32.totalorder %s18, 1
        %s198 = scalar_select %p197, %s18, 1
        %p199 = scmp.lt.s32.totalorder %s19, 0
        %s200 = scalar_select %p199, %s19, 0
        %s201 = sadd.s32 %s200, %s198
        %s202 = smul.addr %s201, 4
        %s203 = scalar_lea.vmem %s0, %s202
      $region36: #{tpu_custom_call.1} parent=31 // pred_fallthru
        _
    $region32: #{tpu_custom_call.1} parent=5 // pred_fallthru
      _
    %p204 = scmp.le.s32.totalorder 1, %s11
    %p205 = scmp.lt.s32.totalorder %s11, 3
    %p206 = pnand %p204, %p205
    %p207 = pneg %p206
    // Predicated region
    $region37: #{tpu_custom_call.1} parent=5 // pred_check
      _
    $region38: #{tpu_custom_call.1} parent=5 // pred_check_branch
      %209 = sbr.rel (%p206) target = $region40
    $region39: #{tpu_custom_call.1} parent=5 // pred_region
      %s210 = ssub.s32 %s11, 1
      %p211 = scmp.lt.s32.totalorder %s20, 1
      %s212 = scalar_select %p211, %s20, 1
      %p213 = scmp.lt.s32.totalorder %s21, 0
      %s214 = scalar_select %p213, %s21, 0
      %s215 = sadd.s32 %s214, %s212
      %s216 = smul.addr %s215, 4
      %s217 = scalar_lea.vmem %s0, %s216
      %p218 = pneg %p51
      %p219 = pneg %p48
      %p220 = pneg %p72
      %p221 = pneg %p69
      %p222 = pneg %p93
      %p223 = pneg %p90
      %p224 = pneg %p114
      %p225 = pneg %p111
      %p226 = pneg %p135
      %p227 = pneg %p132
      %p228 = pneg %p163
      %p229 = pneg %p160
      %p230 = scmp.lt.s32.totalorder %s20, 1
      %s231 = scalar_select %p230, %s20, 1
      %p232 = scmp.lt.s32.totalorder %s21, 0
      %s233 = scalar_select %p232, %s21, 0
      %s234 = smul.addr %s231, 16
      %s235 = sadd.s32 %s233, %s234
      %s236 = smul.addr %s235, 8
      %s237 = scalar_lea.vmem %s5, %s236
      %p238 = scmp.lt.s32.totalorder %s20, 1
      %s239 = scalar_select %p238, %s20, 1
      %p240 = scmp.lt.s32.totalorder %s21, 0
      %s241 = scalar_select %p240, %s21, 0
      %s242 = sadd.s32 %s241, %s239
      %s243 = smul.addr %s242, 4
      %s244 = scalar_lea.vmem %s0, %s243
      %p245 = scmp.lt.s32.totalorder %s20, 1
      %s246 = scalar_select %p245, %s20, 1
      %p247 = scmp.lt.s32.totalorder %s21, 0
      %s248 = scalar_select %p247, %s21, 0
      %s249 = smul.addr %s246, 16
      %s250 = sadd.s32 %s248, %s249
      %s251 = smul.addr %s250, 8
      %s252 = scalar_lea.vmem %s5, %s251
      %v254 = vld [vmem:[%s244] sm:$0x7]
      %v255 = vld [vmem:[%s1] sm:$0xff]
      %v256 = vld [vmem:[%s1 + $0x8] sm:$0xff]
      %v257 = vld [vmem:[%s1 + $0x10] sm:$0xff]
      %v258 = vld [vmem:[%s1 + $0x18] sm:$0xff]
      %v259 = vld [vmem:[%s1 + $0x20] sm:$0xff]
      %v260 = vld [vmem:[%s1 + $0x28] sm:$0xff]
      %v261 = vld [vmem:[%s1 + $0x30] sm:$0xff]
      %v262 = vld [vmem:[%s1 + $0x38] sm:$0xff]
      %v263 = vld [vmem:[%s1 + $0x40] sm:$0xff]
      %v264 = vld [vmem:[%s1 + $0x48] sm:$0xff]
      %v265 = vld [vmem:[%s1 + $0x50] sm:$0xff]
      %v266 = vld [vmem:[%s1 + $0x58] sm:$0xff]
      %v267 = vld [vmem:[%s1 + $0x60] sm:$0xff]
      %v268 = vld [vmem:[%s1 + $0x68] sm:$0xff]
      %v269 = vld [vmem:[%s1 + $0x70] sm:$0xff]
      %v270 = vld [vmem:[%s1 + $0x78] sm:$0xff]
      %272 = vset.pattern.permute.xlu0 0
      %273 = vperm.xlu0 %272, %v255
      %v274 = vpop.permute.xlu0 %273
      %277 = vset.pattern.permute.xlu0 0
      %278 = vperm.xlu0 %277, %v256
      %v279 = vpop.permute.xlu0 %278
      %282 = vset.pattern.permute.xlu0 0
      %283 = vperm.xlu0 %282, %v257
      %v284 = vpop.permute.xlu0 %283
      %287 = vset.pattern.permute.xlu0 0
      %288 = vperm.xlu0 %287, %v258
      %v289 = vpop.permute.xlu0 %288
      %292 = vset.pattern.permute.xlu0 0
      %293 = vperm.xlu0 %292, %v259
      %v294 = vpop.permute.xlu0 %293
      %297 = vset.pattern.permute.xlu0 0
      %298 = vperm.xlu0 %297, %v260
      %v299 = vpop.permute.xlu0 %298
      %302 = vset.pattern.permute.xlu0 0
      %303 = vperm.xlu0 %302, %v261
      %v304 = vpop.permute.xlu0 %303
      %307 = vset.pattern.permute.xlu0 0
      %308 = vperm.xlu0 %307, %v262
      %v309 = vpop.permute.xlu0 %308
      %312 = vset.pattern.permute.xlu0 0
      %313 = vperm.xlu0 %312, %v263
      %v314 = vpop.permute.xlu0 %313
      %317 = vset.pattern.permute.xlu0 0
      %318 = vperm.xlu0 %317, %v264
      %v319 = vpop.permute.xlu0 %318
      %322 = vset.pattern.permute.xlu0 0
      %323 = vperm.xlu0 %322, %v265
      %v324 = vpop.permute.xlu0 %323
      %327 = vset.pattern.permute.xlu0 0
      %328 = vperm.xlu0 %327, %v266
      %v329 = vpop.permute.xlu0 %328
      %332 = vset.pattern.permute.xlu0 0
      %333 = vperm.xlu0 %332, %v267
      %v334 = vpop.permute.xlu0 %333
      %337 = vset.pattern.permute.xlu0 0
      %338 = vperm.xlu0 %337, %v268
      %v339 = vpop.permute.xlu0 %338
      %342 = vset.pattern.permute.xlu0 0
      %343 = vperm.xlu0 %342, %v269
      %v344 = vpop.permute.xlu0 %343
      %347 = vset.pattern.permute.xlu0 0
      %348 = vperm.xlu0 %347, %v270
      %v349 = vpop.permute.xlu0 %348
      %v351 = vlaneseq
      %v352 = vshrl.u32 %v351, 7
      %v353 = vsub.s32 0, %v352
      %v354 = vrot.slane %v254, %v353
      %v355 = vmul.f32 %v274, %v354
      %v356 = vmul.f32 %v279, %v354
      %v357 = vmul.f32 %v284, %v354
      %v358 = vmul.f32 %v289, %v354
      %v359 = vmul.f32 %v294, %v354
      %v360 = vmul.f32 %v299, %v354
      %v361 = vmul.f32 %v304, %v354
      %v362 = vmul.f32 %v309, %v354
      %v363 = vmul.f32 %v314, %v354
      %v364 = vmul.f32 %v319, %v354
      %v365 = vmul.f32 %v324, %v354
      %v366 = vmul.f32 %v329, %v354
      %v367 = vmul.f32 %v334, %v354
      %v368 = vmul.f32 %v339, %v354
      %v369 = vmul.f32 %v344, %v354
      %v370 = vmul.f32 %v349, %v354
      %371 = vset.pattern.permute.xlu0 1
      %372 = vperm.xlu0 %371, %v255
      %v373 = vpop.permute.xlu0 %372
      %375 = vset.pattern.permute.xlu0 1
      %376 = vperm.xlu0 %375, %v256
      %v377 = vpop.permute.xlu0 %376
      %379 = vset.pattern.permute.xlu0 1
      %380 = vperm.xlu0 %379, %v257
      %v381 = vpop.permute.xlu0 %380
      %383 = vset.pattern.permute.xlu0 1
      %384 = vperm.xlu0 %383, %v258
      %v385 = vpop.permute.xlu0 %384
      %387 = vset.pattern.permute.xlu0 1
      %388 = vperm.xlu0 %387, %v259
      %v389 = vpop.permute.xlu0 %388
      %391 = vset.pattern.permute.xlu0 1
      %392 = vperm.xlu0 %391, %v260
      %v393 = vpop.permute.xlu0 %392
      %395 = vset.pattern.permute.xlu0 1
      %396 = vperm.xlu0 %395, %v261
      %v397 = vpop.permute.xlu0 %396
      %399 = vset.pattern.permute.xlu0 1
      %400 = vperm.xlu0 %399, %v262
      %v401 = vpop.permute.xlu0 %400
      %403 = vset.pattern.permute.xlu0 1
      %404 = vperm.xlu0 %403, %v263
      %v405 = vpop.permute.xlu0 %404
      %407 = vset.pattern.permute.xlu0 1
      %408 = vperm.xlu0 %407, %v264
      %v409 = vpop.permute.xlu0 %408
      %411 = vset.pattern.permute.xlu0 1
      %412 = vperm.xlu0 %411, %v265
      %v413 = vpop.permute.xlu0 %412
      %415 = vset.pattern.permute.xlu0 1
      %416 = vperm.xlu0 %415, %v266
      %v417 = vpop.permute.xlu0 %416
      %419 = vset.pattern.permute.xlu0 1
      %420 = vperm.xlu0 %419, %v267
      %v421 = vpop.permute.xlu0 %420
      %423 = vset.pattern.permute.xlu0 1
      %424 = vperm.xlu0 %423, %v268
      %v425 = vpop.permute.xlu0 %424
      %427 = vset.pattern.permute.xlu0 1
      %428 = vperm.xlu0 %427, %v269
      %v429 = vpop.permute.xlu0 %428
      %431 = vset.pattern.permute.xlu0 1
      %432 = vperm.xlu0 %431, %v270
      %v433 = vpop.permute.xlu0 %432
      %v435 = vlaneseq
      %v436 = vshrl.u32 %v435, 7
      %v437 = vsub.s32 1, %v436
      %v438 = vrot.slane %v254, %v437
      %v439 = vmul.f32 %v373, %v438
      %v440 = vmul.f32 %v377, %v438
      %v441 = vmul.f32 %v381, %v438
      %v442 = vmul.f32 %v385, %v438
      %v443 = vmul.f32 %v389, %v438
      %v444 = vmul.f32 %v393, %v438
      %v445 = vmul.f32 %v397, %v438
      %v446 = vmul.f32 %v401, %v438
      %v447 = vmul.f32 %v405, %v438
      %v448 = vmul.f32 %v409, %v438
      %v449 = vmul.f32 %v413, %v438
      %v450 = vmul.f32 %v417, %v438
      %v451 = vmul.f32 %v421, %v438
      %v452 = vmul.f32 %v425, %v438
      %v453 = vmul.f32 %v429, %v438
      %v454 = vmul.f32 %v433, %v438
      %v455 = vadd.f32 %v355, %v439
      %v456 = vadd.f32 %v356, %v440
      %v457 = vadd.f32 %v357, %v441
      %v458 = vadd.f32 %v358, %v442
      %v459 = vadd.f32 %v359, %v443
      %v460 = vadd.f32 %v360, %v444
      %v461 = vadd.f32 %v361, %v445
      %v462 = vadd.f32 %v362, %v446
      %v463 = vadd.f32 %v363, %v447
      %v464 = vadd.f32 %v364, %v448
      %v465 = vadd.f32 %v365, %v449
      %v466 = vadd.f32 %v366, %v450
      %v467 = vadd.f32 %v367, %v451
      %v468 = vadd.f32 %v368, %v452
      %v469 = vadd.f32 %v369, %v453
      %v470 = vadd.f32 %v370, %v454
      %471 = vset.pattern.permute.xlu0 2
      %472 = vperm.xlu0 %471, %v255
      %v473 = vpop.permute.xlu0 %472
      %475 = vset.pattern.permute.xlu0 2
      %476 = vperm.xlu0 %475, %v256
      %v477 = vpop.permute.xlu0 %476
      %479 = vset.pattern.permute.xlu0 2
      %480 = vperm.xlu0 %479, %v257
      %v481 = vpop.permute.xlu0 %480
      %483 = vset.pattern.permute.xlu0 2
      %484 = vperm.xlu0 %483, %v258
      %v485 = vpop.permute.xlu0 %484
      %487 = vset.pattern.permute.xlu0 2
      %488 = vperm.xlu0 %487, %v259
      %v489 = vpop.permute.xlu0 %488
      %491 = vset.pattern.permute.xlu0 2
      %492 = vperm.xlu0 %491, %v260
      %v493 = vpop.permute.xlu0 %492
      %495 = vset.pattern.permute.xlu0 2
      %496 = vperm.xlu0 %495, %v261
      %v497 = vpop.permute.xlu0 %496
      %499 = vset.pattern.permute.xlu0 2
      %500 = vperm.xlu0 %499, %v262
      %v501 = vpop.permute.xlu0 %500
      %503 = vset.pattern.permute.xlu0 2
      %504 = vperm.xlu0 %503, %v263
      %v505 = vpop.permute.xlu0 %504
      %507 = vset.pattern.permute.xlu0 2
      %508 = vperm.xlu0 %507, %v264
      %v509 = vpop.permute.xlu0 %508
      %511 = vset.pattern.permute.xlu0 2
      %512 = vperm.xlu0 %511, %v265
      %v513 = vpop.permute.xlu0 %512
      %515 = vset.pattern.permute.xlu0 2
      %516 = vperm.xlu0 %515, %v266
      %v517 = vpop.permute.xlu0 %516
      %519 = vset.pattern.permute.xlu0 2
      %520 = vperm.xlu0 %519, %v267
      %v521 = vpop.permute.xlu0 %520
      %523 = vset.pattern.permute.xlu0 2
      %524 = vperm.xlu0 %523, %v268
      %v525 = vpop.permute.xlu0 %524
      %527 = vset.pattern.permute.xlu0 2
      %528 = vperm.xlu0 %527, %v269
      %v529 = vpop.permute.xlu0 %528
      %531 = vset.pattern.permute.xlu0 2
      %532 = vperm.xlu0 %531, %v270
      %v533 = vpop.permute.xlu0 %532
      %v535 = vlaneseq
      %v536 = vshrl.u32 %v535, 7
      %v537 = vsub.s32 2, %v536
      %v538 = vrot.slane %v254, %v537
      %v539 = vmul.f32 %v473, %v538
      %v540 = vmul.f32 %v477, %v538
      %v541 = vmul.f32 %v481, %v538
      %v542 = vmul.f32 %v485, %v538
      %v543 = vmul.f32 %v489, %v538
      %v544 = vmul.f32 %v493, %v538
      %v545 = vmul.f32 %v497, %v538
      %v546 = vmul.f32 %v501, %v538
      %v547 = vmul.f32 %v505, %v538
      %v548 = vmul.f32 %v509, %v538
      %v549 = vmul.f32 %v513, %v538
      %v550 = vmul.f32 %v517, %v538
      %v551 = vmul.f32 %v521, %v538
      %v552 = vmul.f32 %v525, %v538
      %v553 = vmul.f32 %v529, %v538
      %v554 = vmul.f32 %v533, %v538
      %v555 = vadd.f32 %v455, %v539
      %v556 = vadd.f32 %v456, %v540
      %v557 = vadd.f32 %v457, %v541
      %v558 = vadd.f32 %v458, %v542
      %v559 = vadd.f32 %v459, %v543
      %v560 = vadd.f32 %v460, %v544
      %v561 = vadd.f32 %v461, %v545
      %v562 = vadd.f32 %v462, %v546
      %v563 = vadd.f32 %v463, %v547
      %v564 = vadd.f32 %v464, %v548
      %v565 = vadd.f32 %v465, %v549
      %v566 = vadd.f32 %v466, %v550
      %v567 = vadd.f32 %v467, %v551
      %v568 = vadd.f32 %v468, %v552
      %v569 = vadd.f32 %v469, %v553
      %v570 = vadd.f32 %v470, %v554
      %v571 = vld [vmem:[%s2] sm:$0xff]
      %v572 = vld [vmem:[%s2 + $0x8] sm:$0xff]
      %v573 = vld [vmem:[%s2 + $0x10] sm:$0xff]
      %v574 = vld [vmem:[%s2 + $0x18] sm:$0xff]
      %v575 = vld [vmem:[%s2 + $0x20] sm:$0xff]
      %v576 = vld [vmem:[%s2 + $0x28] sm:$0xff]
      %v577 = vld [vmem:[%s2 + $0x30] sm:$0xff]
      %v578 = vld [vmem:[%s2 + $0x38] sm:$0xff]
      %v579 = vld [vmem:[%s2 + $0x40] sm:$0xff]
      %v580 = vld [vmem:[%s2 + $0x48] sm:$0xff]
      %v581 = vld [vmem:[%s2 + $0x50] sm:$0xff]
      %v582 = vld [vmem:[%s2 + $0x58] sm:$0xff]
      %v583 = vld [vmem:[%s2 + $0x60] sm:$0xff]
      %v584 = vld [vmem:[%s2 + $0x68] sm:$0xff]
      %v585 = vld [vmem:[%s2 + $0x70] sm:$0xff]
      %v586 = vld [vmem:[%s2 + $0x78] sm:$0xff]
      %588 = vset.pattern.permute.xlu0 0
      %589 = vperm.xlu0 %588, %v571
      %v590 = vpop.permute.xlu0 %589
      %593 = vset.pattern.permute.xlu0 0
      %594 = vperm.xlu0 %593, %v572
      %v595 = vpop.permute.xlu0 %594
      %598 = vset.pattern.permute.xlu0 0
      %599 = vperm.xlu0 %598, %v573
      %v600 = vpop.permute.xlu0 %599
      %603 = vset.pattern.permute.xlu0 0
      %604 = vperm.xlu0 %603, %v574
      %v605 = vpop.permute.xlu0 %604
      %608 = vset.pattern.permute.xlu0 0
      %609 = vperm.xlu0 %608, %v575
      %v610 = vpop.permute.xlu0 %609
      %613 = vset.pattern.permute.xlu0 0
      %614 = vperm.xlu0 %613, %v576
      %v615 = vpop.permute.xlu0 %614
      %618 = vset.pattern.permute.xlu0 0
      %619 = vperm.xlu0 %618, %v577
      %v620 = vpop.permute.xlu0 %619
      %623 = vset.pattern.permute.xlu0 0
      %624 = vperm.xlu0 %623, %v578
      %v625 = vpop.permute.xlu0 %624
      %628 = vset.pattern.permute.xlu0 0
      %629 = vperm.xlu0 %628, %v579
      %v630 = vpop.permute.xlu0 %629
      %633 = vset.pattern.permute.xlu0 0
      %634 = vperm.xlu0 %633, %v580
      %v635 = vpop.permute.xlu0 %634
      %638 = vset.pattern.permute.xlu0 0
      %639 = vperm.xlu0 %638, %v581
      %v640 = vpop.permute.xlu0 %639
      %643 = vset.pattern.permute.xlu0 0
      %644 = vperm.xlu0 %643, %v582
      %v645 = vpop.permute.xlu0 %644
      %648 = vset.pattern.permute.xlu0 0
      %649 = vperm.xlu0 %648, %v583
      %v650 = vpop.permute.xlu0 %649
      %653 = vset.pattern.permute.xlu0 0
      %654 = vperm.xlu0 %653, %v584
      %v655 = vpop.permute.xlu0 %654
      %658 = vset.pattern.permute.xlu0 0
      %659 = vperm.xlu0 %658, %v585
      %v660 = vpop.permute.xlu0 %659
      %663 = vset.pattern.permute.xlu0 0
      %664 = vperm.xlu0 %663, %v586
      %v665 = vpop.permute.xlu0 %664
      %v667 = vadd.f32 %v555, %v590
      %v668 = vadd.f32 %v556, %v595
      %v669 = vadd.f32 %v557, %v600
      %v670 = vadd.f32 %v558, %v605
      %v671 = vadd.f32 %v559, %v610
      %v672 = vadd.f32 %v560, %v615
      %v673 = vadd.f32 %v561, %v620
      %v674 = vadd.f32 %v562, %v625
      %v675 = vadd.f32 %v563, %v630
      %v676 = vadd.f32 %v564, %v635
      %v677 = vadd.f32 %v565, %v640
      %v678 = vadd.f32 %v566, %v645
      %v679 = vadd.f32 %v567, %v650
      %v680 = vadd.f32 %v568, %v655
      %v681 = vadd.f32 %v569, %v660
      %v682 = vadd.f32 %v570, %v665
      %v683 = vmax.f32 %v667, 0.0
      %v684 = vmax.f32 %v668, 0.0
      %v685 = vmax.f32 %v669, 0.0
      %v686 = vmax.f32 %v670, 0.0
      %v687 = vmax.f32 %v671, 0.0
      %v688 = vmax.f32 %v672, 0.0
      %v689 = vmax.f32 %v673, 0.0
      %v690 = vmax.f32 %v674, 0.0
      %v691 = vmax.f32 %v675, 0.0
      %v692 = vmax.f32 %v676, 0.0
      %v693 = vmax.f32 %v677, 0.0
      %v694 = vmax.f32 %v678, 0.0
      %v695 = vmax.f32 %v679, 0.0
      %v696 = vmax.f32 %v680, 0.0
      %v697 = vmax.f32 %v681, 0.0
      %v698 = vmax.f32 %v682, 0.0
      %v699 = vld [vmem:[%s3] sm:$0xf]
      %v700 = vld [vmem:[%s3 + $0x4] sm:$0xf]
      %v701 = vld [vmem:[%s3 + $0x8] sm:$0xf]
      %v702 = vld [vmem:[%s3 + $0xc] sm:$0xf]
      %v703 = vld [vmem:[%s3 + $0x10] sm:$0xf]
      %v704 = vld [vmem:[%s3 + $0x14] sm:$0xf]
      %v705 = vld [vmem:[%s3 + $0x18] sm:$0xf]
      %v706 = vld [vmem:[%s3 + $0x1c] sm:$0xf]
      %v707 = vld [vmem:[%s3 + $0x20] sm:$0xf]
      %v708 = vld [vmem:[%s3 + $0x24] sm:$0xf]
      %v709 = vld [vmem:[%s3 + $0x28] sm:$0xf]
      %v710 = vld [vmem:[%s3 + $0x2c] sm:$0xf]
      %v711 = vld [vmem:[%s3 + $0x30] sm:$0xf]
      %v712 = vld [vmem:[%s3 + $0x34] sm:$0xf]
      %v713 = vld [vmem:[%s3 + $0x38] sm:$0xf]
      %v714 = vld [vmem:[%s3 + $0x3c] sm:$0xf]
      %v715 = vpack.c.bf16 %v684, %v683
      %v716 = vpack.c.bf16 %v686, %v685
      %v717 = vpack.c.bf16 %v688, %v687
      %v718 = vpack.c.bf16 %v690, %v689
      %v719 = vpack.c.bf16 %v692, %v691
      %v720 = vpack.c.bf16 %v694, %v693
      %v721 = vpack.c.bf16 %v696, %v695
      %v722 = vpack.c.bf16 %v698, %v697
      %v723 = vld [vmem:[%s4] sm:$0xff]
      %v724 = vld [vmem:[%s4 + $0x8] sm:$0xff]
      %v725 = vld [vmem:[%s4 + $0x10] sm:$0xff]
      %v726 = vld [vmem:[%s4 + $0x18] sm:$0xff]
      %v727 = vld [vmem:[%s4 + $0x20] sm:$0xff]
      %v728 = vld [vmem:[%s4 + $0x28] sm:$0xff]
      %v729 = vld [vmem:[%s4 + $0x30] sm:$0xff]
      %v730 = vld [vmem:[%s4 + $0x38] sm:$0xff]
      %v731 = vld [vmem:[%s4 + $0x40] sm:$0xff]
      %v732 = vld [vmem:[%s4 + $0x48] sm:$0xff]
      %v733 = vld [vmem:[%s4 + $0x50] sm:$0xff]
      %v734 = vld [vmem:[%s4 + $0x58] sm:$0xff]
      %v735 = vld [vmem:[%s4 + $0x60] sm:$0xff]
      %v736 = vld [vmem:[%s4 + $0x68] sm:$0xff]
      %v737 = vld [vmem:[%s4 + $0x70] sm:$0xff]
      %v738 = vld [vmem:[%s4 + $0x78] sm:$0xff]
      %740 = vset.pattern.permute.xlu0 0
      %741 = vperm.xlu0 %740, %v723
      %v742 = vpop.permute.xlu0 %741
      %745 = vset.pattern.permute.xlu0 0
      %746 = vperm.xlu0 %745, %v724
      %v747 = vpop.permute.xlu0 %746
      %750 = vset.pattern.permute.xlu0 0
      %751 = vperm.xlu0 %750, %v725
      %v752 = vpop.permute.xlu0 %751
      %755 = vset.pattern.permute.xlu0 0
      %756 = vperm.xlu0 %755, %v726
      %v757 = vpop.permute.xlu0 %756
      %760 = vset.pattern.permute.xlu0 0
      %761 = vperm.xlu0 %760, %v727
      %v762 = vpop.permute.xlu0 %761
      %765 = vset.pattern.permute.xlu0 0
      %766 = vperm.xlu0 %765, %v728
      %v767 = vpop.permute.xlu0 %766
      %770 = vset.pattern.permute.xlu0 0
      %771 = vperm.xlu0 %770, %v729
      %v772 = vpop.permute.xlu0 %771
      %775 = vset.pattern.permute.xlu0 0
      %776 = vperm.xlu0 %775, %v730
      %v777 = vpop.permute.xlu0 %776
      %780 = vset.pattern.permute.xlu0 0
      %781 = vperm.xlu0 %780, %v731
      %v782 = vpop.permute.xlu0 %781
      %785 = vset.pattern.permute.xlu0 0
      %786 = vperm.xlu0 %785, %v732
      %v787 = vpop.permute.xlu0 %786
      %790 = vset.pattern.permute.xlu0 0
      %791 = vperm.xlu0 %790, %v733
      %v792 = vpop.permute.xlu0 %791
      %795 = vset.pattern.permute.xlu0 0
      %796 = vperm.xlu0 %795, %v734
      %v797 = vpop.permute.xlu0 %796
      %800 = vset.pattern.permute.xlu0 0
      %801 = vperm.xlu0 %800, %v735
      %v802 = vpop.permute.xlu0 %801
      %805 = vset.pattern.permute.xlu0 0
      %806 = vperm.xlu0 %805, %v736
      %v807 = vpop.permute.xlu0 %806
      %810 = vset.pattern.permute.xlu0 0
      %811 = vperm.xlu0 %810, %v737
      %v812 = vpop.permute.xlu0 %811
      %815 = vset.pattern.permute.xlu0 0
      %816 = vperm.xlu0 %815, %v738
      %v817 = vpop.permute.xlu0 %816
      %v835 = vunpack.c.l.b16 %v699
      %v836 = vunpack.c.l.b16 %v700
      %v837 = vunpack.c.l.b16 %v701
      %v838 = vunpack.c.l.b16 %v702
      %v839 = vunpack.c.l.b16 %v703
      %v840 = vunpack.c.l.b16 %v704
      %v841 = vunpack.c.l.b16 %v705
      %v842 = vunpack.c.l.b16 %v706
      %v843 = vunpack.c.l.b16 %v707
      %v844 = vunpack.c.l.b16 %v708
      %v845 = vunpack.c.l.b16 %v709
      %v846 = vunpack.c.l.b16 %v710
      %v847 = vunpack.c.l.b16 %v711
      %v848 = vunpack.c.l.b16 %v712
      %v849 = vunpack.c.l.b16 %v713
      %v850 = vunpack.c.l.b16 %v714
      %v851 = vpack.c.b16 %v836, %v835
      %v852 = vpack.c.b16 %v838, %v837
      %v853 = vpack.c.b16 %v840, %v839
      %v854 = vpack.c.b16 %v842, %v841
      %v855 = vpack.c.b16 %v844, %v843
      %v856 = vpack.c.b16 %v846, %v845
      %v857 = vpack.c.b16 %v848, %v847
      %v858 = vpack.c.b16 %v850, %v849
      %867 = vmatprep.subr.bf16.mxu0 0
      %868 = vmatpush1.bf16.msra.mxu0 %v715
      %869 = vmatprep.subr.bf16.mxu0 0
      %870 = vmatpush1.bf16.msra.mxu0 %v716
      %871 = vmatprep.subr.bf16.mxu0 0
      %872 = vmatpush1.bf16.msra.mxu0 %v717
      %873 = vmatprep.subr.bf16.mxu0 0
      %874 = vmatpush1.bf16.msra.mxu0 %v718
      %875 = vmatprep.subr.bf16.mxu0 0
      %876 = vmatpush1.bf16.msra.mxu0 %v719
      %877 = vmatprep.subr.bf16.mxu0 0
      %878 = vmatpush1.bf16.msra.mxu0 %v720
      %879 = vmatprep.subr.bf16.mxu0 0
      %880 = vmatpush1.bf16.msra.mxu0 %v721
      %881 = vmatprep.subr.bf16.mxu0 0
      %882 = vmatpush1.bf16.msra.mxu0 %v722
      %883 = vmatprep.subr.bf16.mxu0 0
      %884 = vmatpush1.bf16.msra.mxu0 0
      %885 = vmatprep.subr.bf16.mxu0 0
      %886 = vmatpush1.bf16.msra.mxu0 0
      %887 = vmatprep.subr.bf16.mxu0 0
      %888 = vmatpush1.bf16.msra.mxu0 0
      %889 = vmatprep.subr.bf16.mxu0 0
      %890 = vmatpush1.bf16.msra.mxu0 0
      %891 = vmatprep.subr.bf16.mxu0 0
      %892 = vmatpush1.bf16.msra.mxu0 0
      %893 = vmatprep.subr.bf16.mxu0 0
      %894 = vmatpush1.bf16.msra.mxu0 0
      %895 = vmatprep.subr.bf16.mxu0 0
      %896 = vmatpush1.bf16.msra.mxu0 0
      %897 = vmatprep.subr.bf16.mxu0 0
      %898 = vmatpush1.bf16.msra.mxu0 0
      %899 = vmatprep.mubr.bf16.mxu0 0
      %900 = vmatmul.mubr.bf16.gmra.mrb[0].mxu0 %v851
      %v901 = vpop.f32.mrb[0].mxu0
      %v902 = vadd.f32 %v742, %v901
      %v903 = vpop.f32.mrb[0].mxu0
      %v904 = vpop.f32.mrb[0].mxu0
      %v905 = vadd.f32 %v747, %v904
      %v906 = vpop.f32.mrb[0].mxu0
      %907 = vmatprep.mubr.bf16.mxu0 0
      %908 = vmatmul.mubr.bf16.gmra.mrb[0].mxu0 %v852
      %v909 = vpop.f32.mrb[0].mxu0
      %v910 = vadd.f32 %v752, %v909
      %v911 = vpop.f32.mrb[0].mxu0
      %v912 = vpop.f32.mrb[0].mxu0
      %v913 = vadd.f32 %v757, %v912
      %v914 = vpop.f32.mrb[0].mxu0
      %915 = vmatprep.mubr.bf16.mxu0 0
      %916 = vmatmul.mubr.bf16.gmra.mrb[0].mxu0 %v853
      %v917 = vpop.f32.mrb[0].mxu0
      %v918 = vadd.f32 %v762, %v917
      %v919 = vpop.f32.mrb[0].mxu0
      %v920 = vpop.f32.mrb[0].mxu0
      %v921 = vadd.f32 %v767, %v920
      %v922 = vpop.f32.mrb[0].mxu0
      %923 = vmatprep.mubr.bf16.mxu0 0
      %924 = vmatmul.mubr.bf16.gmra.mrb[0].mxu0 %v854
      %v925 = vpop.f32.mrb[0].mxu0
      %v926 = vadd.f32 %v772, %v925
      %v927 = vpop.f32.mrb[0].mxu0
      %v928 = vpop.f32.mrb[0].mxu0
      %v929 = vadd.f32 %v777, %v928
      %v930 = vpop.f32.mrb[0].mxu0
      %931 = vmatprep.mubr.bf16.mxu0 0
      %932 = vmatmul.mubr.bf16.gmra.mrb[0].mxu0 %v855
      %v933 = vpop.f32.mrb[0].mxu0
      %v934 = vadd.f32 %v782, %v933
      %v935 = vpop.f32.mrb[0].mxu0
      %v936 = vpop.f32.mrb[0].mxu0
      %v937 = vadd.f32 %v787, %v936
      %v938 = vpop.f32.mrb[0].mxu0
      %939 = vmatprep.mubr.bf16.mxu0 0
      %940 = vmatmul.mubr.bf16.gmra.mrb[0].mxu0 %v856
      %v941 = vpop.f32.mrb[0].mxu0
      %v942 = vadd.f32 %v792, %v941
      %v943 = vpop.f32.mrb[0].mxu0
      %v944 = vpop.f32.mrb[0].mxu0
      %v945 = vadd.f32 %v797, %v944
      %v946 = vpop.f32.mrb[0].mxu0
      %947 = vmatprep.mubr.bf16.mxu0 0
      %948 = vmatmul.mubr.bf16.gmra.mrb[0].mxu0 %v857
      %v949 = vpop.f32.mrb[0].mxu0
      %v950 = vadd.f32 %v802, %v949
      %v951 = vpop.f32.mrb[0].mxu0
      %v952 = vpop.f32.mrb[0].mxu0
      %v953 = vadd.f32 %v807, %v952
      %v954 = vpop.f32.mrb[0].mxu0
      %955 = vmatprep.mubr.bf16.mxu0 0
      %956 = vmatmul.mubr.bf16.gmra.mrb[0].mxu0 %v858
      %v957 = vpop.f32.mrb[0].mxu0
      %v958 = vadd.f32 %v812, %v957
      %v959 = vpop.f32.mrb[0].mxu0
      %v960 = vpop.f32.mrb[0].mxu0
      %v961 = vadd.f32 %v817, %v960
      %v962 = vpop.f32.mrb[0].mxu0
      %963 = vdwg.mxu0
      %vm964 = vcmask 523264
      %965 = vst.msk [vmem:[%s252] sm:$0xff] %vm964, %v902
      %966 = vst.msk [vmem:[%s252 + $0x8] sm:$0xff] %vm964, %v905
      %967 = vst.msk [vmem:[%s252 + $0x10] sm:$0xff] %vm964, %v910
      %968 = vst.msk [vmem:[%s252 + $0x18] sm:$0xff] %vm964, %v913
      %969 = vst.msk [vmem:[%s252 + $0x20] sm:$0xff] %vm964, %v918
      %970 = vst.msk [vmem:[%s252 + $0x28] sm:$0xff] %vm964, %v921
      %971 = vst.msk [vmem:[%s252 + $0x30] sm:$0xff] %vm964, %v926
      %972 = vst.msk [vmem:[%s252 + $0x38] sm:$0xff] %vm964, %v929
      %973 = vst.msk [vmem:[%s252 + $0x40] sm:$0xff] %vm964, %v934
      %974 = vst.msk [vmem:[%s252 + $0x48] sm:$0xff] %vm964, %v937
      %975 = vst.msk [vmem:[%s252 + $0x50] sm:$0xff] %vm964, %v942
      %976 = vst.msk [vmem:[%s252 + $0x58] sm:$0xff] %vm964, %v945
      %977 = vst.msk [vmem:[%s252 + $0x60] sm:$0xff] %vm964, %v950
      %978 = vst.msk [vmem:[%s252 + $0x68] sm:$0xff] %vm964, %v953
      %979 = vst.msk [vmem:[%s252 + $0x70] sm:$0xff] %vm964, %v958
      %980 = vst.msk [vmem:[%s252 + $0x78] sm:$0xff] %vm964, %v961
      %p981 = scmp.lt.s32.totalorder %s20, 1
      %s982 = scalar_select %p981, %s20, 1
      %p983 = scmp.lt.s32.totalorder %s21, 0
      %s984 = scalar_select %p983, %s21, 0
      %s985 = smul.addr %s982, 16
      %s986 = sadd.s32 %s984, %s985
      %s987 = smul.addr %s986, 8
      %s988 = scalar_lea.vmem %s5, %s987
      // Predicated region
      $region41: #{tpu_custom_call.1} parent=39 // pred_check
        %p989 = pneg %p160
      $region42: #{tpu_custom_call.1} parent=39 // pred_check_branch
        %991 = sbr.rel (%p989) target = $region44
      $region43: #{tpu_custom_call.1} parent=39 // pred_region
        _
      $region44: #{tpu_custom_call.1} parent=39 // pred_fallthru
        _
    $region40: #{tpu_custom_call.1} parent=5 // pred_fallthru
      _
    %p992 = scmp.le.s32.totalorder 2, %s11
    // Predicated region
    $region45: #{tpu_custom_call.1} parent=5 // pred_check
      %p993 = pneg %p992
    $region46: #{tpu_custom_call.1} parent=5 // pred_check_branch
      %995 = sbr.rel (%p993) target = $region48
    $region47: #{tpu_custom_call.1} parent=5 // pred_region
      %s996 = ssub.s32 %s11, 2
      // Predicated region
      $region49: #{tpu_custom_call.1} parent=47 // pred_check
        %p997 = pneg %p166
      $region50: #{tpu_custom_call.1} parent=47 // pred_check_branch
        %999 = sbr.rel (%p997) target = $region52
      $region51: #{tpu_custom_call.1} parent=47 // pred_region
        %p1000 = scmp.lt.s32.totalorder %s22, 1
        %s1001 = scalar_select %p1000, %s22, 1
        %p1002 = scmp.lt.s32.totalorder %s23, 0
        %s1003 = scalar_select %p1002, %s23, 0
        %s1004 = smul.addr %s1001, 16
        %s1005 = sadd.s32 %s1003, %s1004
        %s1006 = smul.addr %s1005, 8
        %s1007 = scalar_lea.vmem %s5, %s1006
      $region52: #{tpu_custom_call.1} parent=47 // pred_fallthru
        _
    $region48: #{tpu_custom_call.1} parent=5 // pred_fallthru
      _
  $region6: #{tpu_custom_call.1} parent=0 // loop_footer
    %s15 = sadd.s32 1, %s11
  $region7: #{tpu_custom_call.1} parent=0 // loop_footer_branch
    %10 = sbr.rel target = $region3
  $region8: #{tpu_custom_call.1} parent=0 // loop_exit
    _

</llo_original>
